<compile_context>
chip_gen: v7x
topology: tpu7x:2x2x1
jax: 0.10.0
libtpu: 0.0.40
codegen_flags: <defaults>
</compile_context>

<pallas_src>
import functools

import jax
import jax.numpy as jnp
from jax.experimental import pallas as pl
from jax.experimental.pallas import tpu as pltpu


def _round_up(x: int, m: int) -> int:
    return ((x + m - 1) // m) * m


def _vmem_limit_bytes(footprint: int) -> int:
    cap = 64 << 20
    try:
        info = pltpu.get_tpu_info()
        cap = int(getattr(info, "vmem_capacity_bytes", cap))
    except Exception:
        pass
    return int(min(max(2 * footprint, 4 << 20), (3 * cap) // 4))


def _lsr_kernel(h_ref, w_ref, b_ref, loc_ref, scale_ref, *, d_pad):
    """Fused LSR head: one MXU matmul (both heads), f32 bias add, then
    Hardtanh(-6,2)+exp(./2) on the (128-aligned) log-var half only. Emits two
    lane-dense outputs."""
    fused = jnp.dot(h_ref[...], w_ref[...],
                    preferred_element_type=jnp.float32)       # (TB, 2*d_pad) f32
    fused = fused + b_ref[...]                                # bias stays f32
    loc_ref[...] = fused[:, :d_pad].astype(loc_ref.dtype)     # aligned slice
    lv = jnp.clip(fused[:, d_pad:], -6.0, 2.0)                # Hardtanh(-6, 2)
    scale_ref[...] = jnp.exp(lv * 0.5).astype(scale_ref.dtype)


def prepare_lsr_params(w_loc, b_loc, w_lv, b_lv, *, matmul_dtype=jnp.bfloat16):
    """One-time parameter prep: lane-pad each head to a multiple of 128
    columns, fuse into a single (D_in, 2*D_pad) weight + (1, 2*D_pad) bias,
    optionally cast the weight to the MXU streaming dtype (bf16 on all gens;
    bias/accumulation stay f32)."""
    d_in, d_out = w_loc.shape
    d_pad = _round_up(d_out, 128)
    cpad = ((0, 0), (0, d_pad - d_out))
    vpad = (0, d_pad - d_out)
    w_cat = jnp.concatenate([jnp.pad(w_loc, cpad), jnp.pad(w_lv, cpad)], axis=1)
    b_cat = jnp.concatenate([jnp.pad(b_loc, vpad), jnp.pad(b_lv, vpad)])
    b_cat = b_cat.reshape(1, 2 * d_pad).astype(jnp.float32)
    if matmul_dtype is not None:
        w_cat = w_cat.astype(matmul_dtype)
    return w_cat, b_cat, d_out


def lsr_forward(hidden, w_cat, b_cat, d_out, *, block_b=512):
    """Returns (loc, scale) of the Independent Normal posterior, each (B, d_out)."""
    B, D_in = hidden.shape
    two_pad = w_cat.shape[1]
    d_pad = two_pad // 2
    assert w_cat.shape[0] == D_in and d_pad >= d_out

    # Stream matmul operands in the prepared dtype (bf16 halves HBM traffic;
    # in a real model the upstream layer should already emit this dtype so the
    # cast below is a no-op).
    if hidden.dtype != w_cat.dtype:
        hidden = hidden.astype(w_cat.dtype)

    # Batch tile: multiple of 8 sublanes, large (per-step overhead ~0.35us),
    # no padding of hidden — Pallas masks the partial last block.
    tb = min(block_b, _round_up(B, 8))
    if B > 8 and pl.cdiv(B, tb) < 2:
        # Keep >=2 grid steps so v7x's two TensorCores both get work.
        tb = max(8, _round_up(pl.cdiv(B, 2), 8))
    grid = (pl.cdiv(B, tb),)

    f32 = 4
    op = jnp.dtype(w_cat.dtype).itemsize
    footprint = (2 * tb * D_in * op            # double-buffered hidden
                 + 2 * D_in * two_pad * op     # weight (count 2 bufs conservatively)
                 + 2 * two_pad * f32           # bias
                 + 2 * 2 * tb * d_pad * f32)   # two double-buffered outputs
    vmem_limit = _vmem_limit_bytes(footprint)

    cost = pl.CostEstimate(
        flops=2 * B * D_in * two_pad,
        transcendentals=B * d_pad,
        bytes_accessed=(B * D_in + D_in * two_pad) * op
                       + (two_pad + 2 * B * d_pad) * f32,
    )

    kernel = functools.partial(_lsr_kernel, d_pad=d_pad)

    def build_and_run(single_buffer_resident):
        if single_buffer_resident:
            try:
                w_spec = pl.BlockSpec((D_in, two_pad), lambda i: (0, 0),
                                      pipeline_mode=pl.Buffered(1))
                b_spec = pl.BlockSpec((1, two_pad), lambda i: (0, 0),
                                      pipeline_mode=pl.Buffered(1))
            except TypeError:
                w_spec = pl.BlockSpec((D_in, two_pad), lambda i: (0, 0))
                b_spec = pl.BlockSpec((1, two_pad), lambda i: (0, 0))
        else:
            w_spec = pl.BlockSpec((D_in, two_pad), lambda i: (0, 0))
            b_spec = pl.BlockSpec((1, two_pad), lambda i: (0, 0))

        return pl.pallas_call(
            kernel,
            out_shape=(jax.ShapeDtypeStruct((B, d_pad), jnp.float32),
                       jax.ShapeDtypeStruct((B, d_pad), jnp.float32)),
            grid_spec=pltpu.PrefetchScalarGridSpec(
                num_scalar_prefetch=0,
                grid=grid,
                in_specs=[
                    pl.BlockSpec((tb, D_in), lambda i: (i, 0)),   # streamed
                    w_spec,                                       # resident
                    b_spec,                                       # resident
                ],
                out_specs=[
                    pl.BlockSpec((tb, d_pad), lambda i: (i, 0)),
                    pl.BlockSpec((tb, d_pad), lambda i: (i, 0)),
                ],
            ),
            compiler_params=pltpu.CompilerParams(
                dimension_semantics=("parallel",),
                vmem_limit_bytes=vmem_limit,
            ),
            cost_estimate=cost,
        )(hidden, w_cat, b_cat)

    try:
        loc_p, scale_p = build_and_run(True)
    except Exception:
        # Defensive fallback if single-buffering of resident blocks is rejected.
        loc_p, scale_p = build_and_run(False)

    return loc_p[:, :d_out], scale_p[:, :d_out]


def _init_params(key, input_dim, out_dim):
    """Deterministic synthetic parameters (shapes dictated by __init__)."""
    k1, k2, k3, k4 = jax.random.split(key, 4)
    s = 1.0 / jnp.sqrt(jnp.float32(input_dim))
    w_loc = jax.random.uniform(k1, (input_dim, out_dim), jnp.float32, -s, s)
    b_loc = jax.random.uniform(k2, (out_dim,), jnp.float32, -s, s)
    w_lv = jax.random.uniform(k3, (input_dim, out_dim), jnp.float32, -s, s)
    b_lv = jax.random.uniform(k4, (out_dim,), jnp.float32, -s, s)
    return w_loc, b_loc, w_lv, b_lv


if __name__ == "__main__":
    # TODO(synk): LSR.forward returns a torch Distribution (Independent Normal);
    # here we return its parameter tensors (loc, scale) — rsample()/log_prob()
    # machinery has no Pallas equivalent and stays host-side / plain JAX.
    B, D_IN, D_OUT = 8, 32, 16
    key = jax.random.PRNGKey(0)
    k_h, k_p = jax.random.split(key)
    hidden = jax.random.normal(k_h, (B, D_IN), jnp.float32)
    w_loc, b_loc, w_lv, b_lv = _init_params(k_p, D_IN, D_OUT)

    ref_loc = hidden @ w_loc + b_loc
    ref_scale = jnp.exp(jnp.clip(hidden @ w_lv + b_lv, -6.0, 2.0) * 0.5)

    # --- f32 operand path: exact check -------------------------------------
    w_cat, b_cat, d_out = prepare_lsr_params(w_loc, b_loc, w_lv, b_lv,
                                             matmul_dtype=None)
    loc, scale = lsr_forward(hidden, w_cat, b_cat, d_out)
    jax.block_until_ready((loc, scale))
    assert loc.shape == (B, D_OUT) and scale.shape == (B, D_OUT)
    assert jnp.allclose(loc, ref_loc, atol=1e-5, rtol=1e-5)
    assert jnp.allclose(scale, ref_scale, atol=1e-5, rtol=1e-5)

    # --- bf16 streamed-operand path (production default) -------------------
    w_cat16, b_cat16, _ = prepare_lsr_params(w_loc, b_loc, w_lv, b_lv)
    loc16, scale16 = lsr_forward(hidden, w_cat16, b_cat16, d_out)
    jax.block_until_ready((loc16, scale16))
    assert jnp.allclose(loc16, ref_loc, atol=3e-2, rtol=3e-2)
    assert jnp.allclose(scale16, ref_scale, atol=3e-2, rtol=3e-2)

    # --- multi-step grid with a masked partial last block ------------------
    B2 = 12
    hidden2 = jax.random.normal(jax.random.PRNGKey(1), (B2, D_IN), jnp.float32)
    loc2, scale2 = lsr_forward(hidden2, w_cat, b_cat, d_out)
    jax.block_until_ready((loc2, scale2))
    ref_loc2 = hidden2 @ w_loc + b_loc
    ref_scale2 = jnp.exp(jnp.clip(hidden2 @ w_lv + b_lv, -6.0, 2.0) * 0.5)
    assert jnp.allclose(loc2, ref_loc2, atol=1e-5, rtol=1e-5)
    assert jnp.allclose(scale2, ref_scale2, atol=1e-5, rtol=1e-5)

    print("KERNEL_OK")
</pallas_src>

<mosaic_0001>
module attributes {stable_mosaic.version = 11 : i64} {
  func.func @_lsr_kernel(%arg0: i32, %arg1: memref<8x32xf32, #tpu.memory_space<vmem>>, %arg2: memref<32x256xf32, #tpu.memory_space<vmem>>, %arg3: memref<1x256xf32, #tpu.memory_space<vmem>>, %arg4: memref<8x128xf32, #tpu.memory_space<vmem>>, %arg5: memref<8x128xf32, #tpu.memory_space<vmem>>) attributes {dimension_semantics = [#tpu.dimension_semantics<parallel>], iteration_bounds = array<i64: 1>, scalar_prefetch = 0 : i64, scratch_operands = 0 : i64, tpu.core_type = #tpu.core_type<tc>, window_params = [{transform_indices = @transform_0, window_bounds = array<i64: 8, 32>}, {pipeline_mode = #tpu.pipeline_mode<synchronous>, transform_indices = @transform_1, window_bounds = array<i64: 32, 256>}, {pipeline_mode = #tpu.pipeline_mode<synchronous>, transform_indices = @transform_2, window_bounds = array<i64: 1, 256>}, {transform_indices = @transform_3, window_bounds = array<i64: 8, 128>}, {transform_indices = @transform_4, window_bounds = array<i64: 8, 128>}]} {
    %c0 = arith.constant 0 : index
    %c0_0 = arith.constant 0 : index
    %0 = vector.load %arg1[%c0, %c0_0] : memref<8x32xf32, #tpu.memory_space<vmem>>, vector<8x32xf32>
    %c0_1 = arith.constant 0 : index
    %c0_2 = arith.constant 0 : index
    %1 = vector.load %arg2[%c0_1, %c0_2] : memref<32x256xf32, #tpu.memory_space<vmem>>, vector<32x256xf32>
    %cst = arith.constant dense<0.000000e+00> : vector<8x256xf32>
    %2 = tpu.matmul %0, %1, %cst {dimension_numbers = #tpu.dot_dimension_numbers<[1], [0], [0], [1], [0, 0, 1, 1], [], []>} : vector<8x32xf32>, vector<32x256xf32>, vector<8x256xf32> -> vector<8x256xf32>
    %c0_3 = arith.constant 0 : index
    %c0_4 = arith.constant 0 : index
    %3 = vector.load %arg3[%c0_3, %c0_4] : memref<1x256xf32, #tpu.memory_space<vmem>>, vector<1x256xf32>
    %4 = vector.broadcast %3 : vector<1x256xf32> to vector<8x256xf32>
    %5 = arith.addf %2, %4 : vector<8x256xf32>
    %6 = vector.extract_strided_slice %5 {offsets = [0, 0], sizes = [8, 128], strides = [1, 1]} : vector<8x256xf32> to vector<8x128xf32>
    %c0_5 = arith.constant 0 : index
    %c0_6 = arith.constant 0 : index
    %7 = vector.load %arg4[%c0_5, %c0_6] : memref<8x128xf32, #tpu.memory_space<vmem>>, vector<8x128xf32>
    tpu.vector_store %arg4[%c0_5, %c0_6], %6 {strides = array<i32>} : memref<8x128xf32, #tpu.memory_space<vmem>>, vector<8x128xf32>,
    %8 = vector.extract_strided_slice %5 {offsets = [0, 128], sizes = [8, 128], strides = [1, 1]} : vector<8x256xf32> to vector<8x128xf32>
    %cst_7 = arith.constant -6.000000e+00 : f32
    %cst_8 = arith.constant 2.000000e+00 : f32
    %9 = vector.broadcast %cst_7 : f32 to vector<8x128xf32>
    %10 = arith.maximumf %9, %8 : vector<8x128xf32>
    %11 = vector.broadcast %cst_8 : f32 to vector<8x128xf32>
    %12 = arith.minimumf %11, %10 : vector<8x128xf32>
    %cst_9 = arith.constant 5.000000e-01 : f32
    %13 = vector.broadcast %cst_9 : f32 to vector<8x128xf32>
    %14 = arith.mulf %12, %13 : vector<8x128xf32>
    %15 = math.exp %14 : vector<8x128xf32>
    %c0_10 = arith.constant 0 : index
    %c0_11 = arith.constant 0 : index
    %16 = vector.load %arg5[%c0_10, %c0_11] : memref<8x128xf32, #tpu.memory_space<vmem>>, vector<8x128xf32>
    tpu.vector_store %arg5[%c0_10, %c0_11], %15 {strides = array<i32>} : memref<8x128xf32, #tpu.memory_space<vmem>>, vector<8x128xf32>,
    return
  }
  func.func @transform_0(%arg0: i32) -> (i32, i32) {
    %c0_i32 = arith.constant 0 : i32
    %c0_i32_0 = arith.constant 0 : i32
    return %arg0, %c0_i32 : i32, i32
  }
  func.func @transform_1(%arg0: i32) -> (i32, i32) {
    %c0_i32 = arith.constant 0 : i32
    %c0_i32_0 = arith.constant 0 : i32
    %c0_i32_1 = arith.constant 0 : i32
    return %c0_i32, %c0_i32_0 : i32, i32
  }
  func.func @transform_2(%arg0: i32) -> (i32, i32) {
    %c0_i32 = arith.constant 0 : i32
    %c0_i32_0 = arith.constant 0 : i32
    %c0_i32_1 = arith.constant 0 : i32
    return %c0_i32, %c0_i32_0 : i32, i32
  }
  func.func @transform_3(%arg0: i32) -> (i32, i32) {
    %c0_i32 = arith.constant 0 : i32
    %c0_i32_0 = arith.constant 0 : i32
    return %arg0, %c0_i32 : i32, i32
  }
  func.func @transform_4(%arg0: i32) -> (i32, i32) {
    %c0_i32 = arith.constant 0 : i32
    %c0_i32_0 = arith.constant 0 : i32
    return %arg0, %c0_i32 : i32, i32
  }
}

module attributes {stable_mosaic.version = 11 : i64} {
  func.func @_lsr_kernel(%arg0: i32, %arg1: memref<8x32xf32, #tpu.memory_space<vmem>>, %arg2: memref<32x256xf32, #tpu.memory_space<vmem>>, %arg3: memref<1x256xf32, #tpu.memory_space<vmem>>, %arg4: memref<8x128xf32, #tpu.memory_space<vmem>>, %arg5: memref<8x128xf32, #tpu.memory_space<vmem>>) attributes {dimension_semantics = [#tpu.dimension_semantics<parallel>], iteration_bounds = array<i64: 1>, scalar_prefetch = 0 : i64, scratch_operands = 0 : i64, tpu.core_type = #tpu.core_type<tc>, window_params = [{transform_indices = @transform_0, window_bounds = array<i64: 8, 32>}, {pipeline_mode = #tpu.pipeline_mode<synchronous>, transform_indices = @transform_1, window_bounds = array<i64: 32, 256>}, {pipeline_mode = #tpu.pipeline_mode<synchronous>, transform_indices = @transform_2, window_bounds = array<i64: 1, 256>}, {transform_indices = @transform_3, window_bounds = array<i64: 8, 128>}, {transform_indices = @transform_4, window_bounds = array<i64: 8, 128>}]} {
    %c0 = arith.constant 0 : index
    %c0_0 = arith.constant 0 : index
    %0 = vector.load %arg1[%c0, %c0_0] : memref<8x32xf32, #tpu.memory_space<vmem>>, vector<8x32xf32>
    %c0_1 = arith.constant 0 : index
    %c0_2 = arith.constant 0 : index
    %1 = vector.load %arg2[%c0_1, %c0_2] : memref<32x256xf32, #tpu.memory_space<vmem>>, vector<32x256xf32>
    %cst = arith.constant dense<0.000000e+00> : vector<8x256xf32>
    %2 = tpu.matmul %0, %1, %cst {dimension_numbers = #tpu.dot_dimension_numbers<[1], [0], [0], [1], [0, 0, 1, 1], [], []>} : vector<8x32xf32>, vector<32x256xf32>, vector<8x256xf32> -> vector<8x256xf32>
    %c0_3 = arith.constant 0 : index
    %c0_4 = arith.constant 0 : index
    %3 = vector.load %arg3[%c0_3, %c0_4] : memref<1x256xf32, #tpu.memory_space<vmem>>, vector<1x256xf32>
    %4 = vector.broadcast %3 : vector<1x256xf32> to vector<8x256xf32>
    %5 = arith.addf %2, %4 : vector<8x256xf32>
    %6 = vector.extract_strided_slice %5 {offsets = [0, 0], sizes = [8, 128], strides = [1, 1]} : vector<8x256xf32> to vector<8x128xf32>
    %c0_5 = arith.constant 0 : index
    %c0_6 = arith.constant 0 : index
    %7 = vector.load %arg4[%c0_5, %c0_6] : memref<8x128xf32, #tpu.memory_space<vmem>>, vector<8x128xf32>
    tpu.vector_store %arg4[%c0_5, %c0_6], %6 {strides = array<i32>} : memref<8x128xf32, #tpu.memory_space<vmem>>, vector<8x128xf32>,
    %8 = vector.extract_strided_slice %5 {offsets = [0, 128], sizes = [8, 128], strides = [1, 1]} : vector<8x256xf32> to vector<8x128xf32>
    %cst_7 = arith.constant -6.000000e+00 : f32
    %cst_8 = arith.constant 2.000000e+00 : f32
    %9 = vector.broadcast %cst_7 : f32 to vector<8x128xf32>
    %10 = arith.maximumf %9, %8 : vector<8x128xf32>
    %11 = vector.broadcast %cst_8 : f32 to vector<8x128xf32>
    %12 = arith.minimumf %11, %10 : vector<8x128xf32>
    %cst_9 = arith.constant 5.000000e-01 : f32
    %13 = vector.broadcast %cst_9 : f32 to vector<8x128xf32>
    %14 = arith.mulf %12, %13 : vector<8x128xf32>
    %15 = math.exp %14 : vector<8x128xf32>
    %c0_10 = arith.constant 0 : index
    %c0_11 = arith.constant 0 : index
    %16 = vector.load %arg5[%c0_10, %c0_11] : memref<8x128xf32, #tpu.memory_space<vmem>>, vector<8x128xf32>
    tpu.vector_store %arg5[%c0_10, %c0_11], %15 {strides = array<i32>} : memref<8x128xf32, #tpu.memory_space<vmem>>, vector<8x128xf32>,
    return
  }
  func.func @transform_0(%arg0: i32) -> (i32, i32) {
    %c0_i32 = arith.constant 0 : i32
    %c0_i32_0 = arith.constant 0 : i32
    return %arg0, %c0_i32 : i32, i32
  }
  func.func @transform_1(%arg0: i32) -> (i32, i32) {
    %c0_i32 = arith.constant 0 : i32
    %c0_i32_0 = arith.constant 0 : i32
    %c0_i32_1 = arith.constant 0 : i32
    return %c0_i32, %c0_i32_0 : i32, i32
  }
  func.func @transform_2(%arg0: i32) -> (i32, i32) {
    %c0_i32 = arith.constant 0 : i32
    %c0_i32_0 = arith.constant 0 : i32
    %c0_i32_1 = arith.constant 0 : i32
    return %c0_i32, %c0_i32_0 : i32, i32
  }
  func.func @transform_3(%arg0: i32) -> (i32, i32) {
    %c0_i32 = arith.constant 0 : i32
    %c0_i32_0 = arith.constant 0 : i32
    return %arg0, %c0_i32 : i32, i32
  }
  func.func @transform_4(%arg0: i32) -> (i32, i32) {
    %c0_i32 = arith.constant 0 : i32
    %c0_i32_0 = arith.constant 0 : i32
    return %arg0, %c0_i32 : i32, i32
  }
}

</mosaic_0001>

<llo_original>
// kernel: tpu_custom_call.1
$region0: #{tpu_custom_call.1}
  #allocation0 [shape = 'u32[]', space=smem, size = 0x4, offset = 0x4, fixed_abs, tag = 'smem constant byte address 0x4 - core index']
  #allocation1 [shape = 'u32[144,128]{1,0:T(1,128)}', space=vmem, size = 0x12000, scoped, tag = 'internal scratch']
  %s0 = inlined_call_operand.hbm [shape: f32[8,32], index: 0, kind: input, shape index: {}]
  %s1 = inlined_call_operand.hbm [shape: f32[32,256], index: 1, kind: input, shape index: {}]
  %s2 = inlined_call_operand.vmem [shape: f32[1,256], index: 2, kind: input, shape index: {}]
  %s3 = inlined_call_operand.hbm [shape: f32[8,128], index: 3, kind: output, shape index: {0}]
  %s4 = inlined_call_operand.hbm [shape: f32[8,128], index: 4, kind: output, shape index: {1}]
  %5 = xla_tuple %s3, %s4
  %s6 = sld [smem:[#allocation0]]
  $region38: #{tpu_custom_call.1} parent=0
    _
  %s8 = ssub.s32 1, %s6
  %s9 = scalar_select 0, %s8, %s6
  $region1: #{tpu_custom_call.1} parent=0
    #allocation2 [shape = 'u8[4096]{0}', space=vmem, size = 0x1000, scoped, tag = 'input window, operand 0, single buffered']
    #allocation3 [shape = 's32[1]{0}', space=sflag, size = 0x4, scoped, tag = 'scoped memory for tpu_custom_call.1']
    #allocation4 [shape = 's32[1]{0}', space=sflag, size = 0x4, scoped, tag = 'scoped memory for tpu_custom_call.1']
    #allocation5 [shape = 'u8[32768]{0}', space=vmem, size = 0x8000, scoped, tag = 'input window, operand 1, single buffered']
    #allocation6 [shape = 's32[1]{0}', space=sflag, size = 0x4, scoped, tag = 'scoped memory for tpu_custom_call.1']
    #allocation7 [shape = 'u8[4096]{0}', space=vmem, size = 0x1000, scoped, tag = 'output window, operand 0, single buffered']
    #allocation8 [shape = 'u8[4096]{0}', space=vmem, size = 0x1000, scoped, tag = 'output window, operand 1, single buffered']
    #allocation9 [shape = 's32[1]{0}', space=sflag, size = 0x4, scoped, tag = 'scoped memory for tpu_custom_call.1']
    %10 = vsyncpa [#allocation3], 0
    %11 = vsyncpa [#allocation6], 0
    %12 = vsyncpa [#allocation4], 0
    %13 = vsyncpa [#allocation9], 0
    // Predicated region
    $region2: #{tpu_custom_call.1} parent=1 // pred_check
      _
    $region3: #{tpu_custom_call.1} parent=1 // pred_check_branch
      %15 = sbr.rel (0) target = $region5
    $region4: #{tpu_custom_call.1} parent=1 // pred_region
      %s17 = ssub.s32 128, 128
      %18 = vsyncadd [#allocation3], %s17
      %s20 = sshll.u32 [#allocation2], 4
      %s21 = int_to_ptr.vmem [resolvable:$true] %s20
      %23 = dma.hbm_to_vmem [thread:$0]  %s0, 128, %s21, [#allocation3]
    $region5: #{tpu_custom_call.1} parent=1 // pred_fallthru
      _
    // Predicated region
    $region6: #{tpu_custom_call.1} parent=1 // pred_check
      _
    $region7: #{tpu_custom_call.1} parent=1 // pred_check_branch
      %25 = sbr.rel (0) target = $region9
    $region8: #{tpu_custom_call.1} parent=1 // pred_region
      %s27 = ssub.s32 1024, 1024
      %28 = vsyncadd [#allocation6], %s27
      %s29 = sshll.u32 [#allocation5], 4
      %s30 = int_to_ptr.vmem [resolvable:$true] %s29
      %35 = dma.hbm_to_vmem [thread:$0]  %s1, 1024, %s30, [#allocation6], 256, 256, 16
    $region9: #{tpu_custom_call.1} parent=1 // pred_fallthru
      _
    // Predicated region
    $region10: #{tpu_custom_call.1} parent=1 // pred_check
      _
    $region11: #{tpu_custom_call.1} parent=1 // pred_check_branch
      %37 = sbr.rel (0) target = $region13
    $region12: #{tpu_custom_call.1} parent=1 // pred_region
      _
    $region13: #{tpu_custom_call.1} parent=1 // pred_fallthru
      _
    // Predicated region
    $region14: #{tpu_custom_call.1} parent=1 // pred_check
      _
    $region15: #{tpu_custom_call.1} parent=1 // pred_check_branch
      %39 = sbr.rel (0) target = $region17
    $region16: #{tpu_custom_call.1} parent=1 // pred_region
      %40 = dma.done [#allocation3], 128
    $region17: #{tpu_custom_call.1} parent=1 // pred_fallthru
      _
    // Predicated region
    $region18: #{tpu_custom_call.1} parent=1 // pred_check
      _
    $region19: #{tpu_custom_call.1} parent=1 // pred_check_branch
      %42 = sbr.rel (0) target = $region21
    $region20: #{tpu_custom_call.1} parent=1 // pred_region
      %43 = dma.done [#allocation6], 1024
    $region21: #{tpu_custom_call.1} parent=1 // pred_fallthru
      _
    %v44 = vld [vmem:[#allocation2] sm:$0xff]
    %v45 = vld [vmem:[#allocation5] sm:$0xff]
    %v46 = vld [vmem:[#allocation5 + $0x8] sm:$0xff]
    %v47 = vld [vmem:[#allocation5 + $0x10] sm:$0xff]
    %v48 = vld [vmem:[#allocation5 + $0x18] sm:$0xff]
    %v49 = vld [vmem:[#allocation5 + $0x20] sm:$0xff]
    %v50 = vld [vmem:[#allocation5 + $0x28] sm:$0xff]
    %v51 = vld [vmem:[#allocation5 + $0x30] sm:$0xff]
    %v52 = vld [vmem:[#allocation5 + $0x38] sm:$0xff]
    %v53 = vld [vmem:[%s2] sm:$0x3]
    %v55 = vlaneseq
    %v56 = vshrl.u32 %v55, 7
    %v57 = vsub.s32 0, %v56
    %v58 = vrot.slane %v53, %v57
    %v59 = vlaneseq
    %v60 = vshrl.u32 %v59, 7
    %v61 = vsub.s32 1, %v60
    %v62 = vrot.slane %v53, %v61
    %vm65 = vcmask 261120
    %v67 = vsel %vm65, %v44, 0
    %69 = vmatprep.subr.mxu0 %v46
    %70 = vmatpush1.msra.mxu0 %v45
    %71 = vmatprep.subr.mxu0 %v48
    %72 = vmatpush1.msra.mxu0 %v47
    %73 = vmatprep.subr.mxu0 %v50
    %74 = vmatpush1.msra.mxu0 %v49
    %75 = vmatprep.subr.mxu0 %v52
    %76 = vmatpush1.msra.mxu0 %v51
    %77 = vmatprep.subr.mxu0 0.0
    %78 = vmatpush1.msra.mxu0 0.0
    %79 = vmatprep.subr.mxu0 0.0
    %80 = vmatpush1.msra.mxu0 0.0
    %81 = vmatprep.subr.mxu0 0.0
    %82 = vmatpush1.msra.mxu0 0.0
    %83 = vmatprep.subr.mxu0 0.0
    %84 = vmatpush1.msra.mxu0 0.0
    %85 = vmatprep.subr.mxu0 0.0
    %86 = vmatpush1.msra.mxu0 0.0
    %87 = vmatprep.subr.mxu0 0.0
    %88 = vmatpush1.msra.mxu0 0.0
    %89 = vmatprep.subr.mxu0 0.0
    %90 = vmatpush1.msra.mxu0 0.0
    %91 = vmatprep.subr.mxu0 0.0
    %92 = vmatpush1.msra.mxu0 0.0
    %93 = vmatprep.subr.mxu0 0.0
    %94 = vmatpush1.msra.mxu0 0.0
    %95 = vmatprep.subr.mxu0 0.0
    %96 = vmatpush1.msra.mxu0 0.0
    %97 = vmatprep.subr.mxu0 0.0
    %98 = vmatpush1.msra.mxu0 0.0
    %99 = vmatprep.subr.mxu0 0.0
    %100 = vmatpush1.msra.mxu0 0.0
    %101 = vmatprep.subr.mxu0 0.0
    %102 = vmatpush1.msra.mxu0 0.0
    %103 = vmatprep.subr.mxu0 0.0
    %104 = vmatpush1.msra.mxu0 0.0
    %105 = vmatprep.subr.mxu0 0.0
    %106 = vmatpush1.msra.mxu0 0.0
    %107 = vmatprep.subr.mxu0 0.0
    %108 = vmatpush1.msra.mxu0 0.0
    %109 = vmatprep.subr.mxu0 0.0
    %110 = vmatpush1.msra.mxu0 0.0
    %111 = vmatprep.subr.mxu0 0.0
    %112 = vmatpush1.msra.mxu0 0.0
    %113 = vmatprep.subr.mxu0 0.0
    %114 = vmatpush1.msra.mxu0 0.0
    %115 = vmatprep.subr.mxu0 0.0
    %116 = vmatpush1.msra.mxu0 0.0
    %117 = vmatprep.subr.mxu0 0.0
    %118 = vmatpush1.msra.mxu0 0.0
    %119 = vmatprep.subr.mxu0 0.0
    %120 = vmatpush1.msra.mxu0 0.0
    %121 = vmatprep.subr.mxu0 0.0
    %122 = vmatpush1.msra.mxu0 0.0
    %123 = vmatprep.subr.mxu0 0.0
    %124 = vmatpush1.msra.mxu0 0.0
    %125 = vmatprep.subr.mxu0 0.0
    %126 = vmatpush1.msra.mxu0 0.0
    %127 = vmatprep.subr.mxu0 0.0
    %128 = vmatpush1.msra.mxu0 0.0
    %129 = vmatprep.subr.mxu0 0.0
    %130 = vmatpush1.msra.mxu0 0.0
    %131 = vmatprep.subr.mxu0 0.0
    %132 = vmatpush1.msra.mxu0 0.0
    %133 = vmatprep.mubr.f32.mxu0 0.0
    %134 = vmatmul.mubr.f32.gmra.mrb[0].mxu0 %v67
    %v135 = vpop.f32.mrb[0].mxu0
    %v136 = vadd.f32 %v58, %v135
    %v137 = vpop.f32.mrb[0].mxu0
    %v138 = vadd.f32 %v62, %v137
    %139 = vdwg.mxu0
    %140 = vst [vmem:[#allocation7] sm:$0xff] %v136
    %v141 = vmax.f32 %v138, -6.0
    %v142 = vmin.f32 %v141, 2.0
    %v143 = vmul.f32 %v142, 0.5
    %v144 = vmul.f32 %v143, 1.442695
    %v145 = vpow.pop %v144
    %146 = vst [vmem:[#allocation8] sm:$0xff] %v145
    // Predicated region
    $region22: #{tpu_custom_call.1} parent=1 // pred_check
      _
    $region23: #{tpu_custom_call.1} parent=1 // pred_check_branch
      %148 = sbr.rel (0) target = $region25
    $region24: #{tpu_custom_call.1} parent=1 // pred_region
      %s150 = ssub.s32 128, 128
      %151 = vsyncadd [#allocation4], %s150
      %s153 = sshll.u32 [#allocation7], 4
      %s154 = int_to_ptr.vmem [resolvable:$true] %s153
      %156 = dma.vmem_to_hbm [thread:$0]  %s154, 128, %s3, [#allocation4]
    $region25: #{tpu_custom_call.1} parent=1 // pred_fallthru
      _
    // Predicated region
    $region26: #{tpu_custom_call.1} parent=1 // pred_check
      _
    $region27: #{tpu_custom_call.1} parent=1 // pred_check_branch
      %158 = sbr.rel (0) target = $region29
    $region28: #{tpu_custom_call.1} parent=1 // pred_region
      %s160 = ssub.s32 128, 128
      %161 = vsyncadd [#allocation9], %s160
      %s163 = sshll.u32 [#allocation8], 4
      %s164 = int_to_ptr.vmem [resolvable:$true] %s163
      %166 = dma.vmem_to_hbm [thread:$0]  %s164, 128, %s4, [#allocation9]
    $region29: #{tpu_custom_call.1} parent=1 // pred_fallthru
      _
    // Predicated region
    $region30: #{tpu_custom_call.1} parent=1 // pred_check
      _
    $region31: #{tpu_custom_call.1} parent=1 // pred_check_branch
      %168 = sbr.rel (0) target = $region33
    $region32: #{tpu_custom_call.1} parent=1 // pred_region
      %169 = dma.done [#allocation4], 128
    $region33: #{tpu_custom_call.1} parent=1 // pred_fallthru
      _
    // Predicated region
    $region34: #{tpu_custom_call.1} parent=1 // pred_check
      _
    $region35: #{tpu_custom_call.1} parent=1 // pred_check_branch
      %171 = sbr.rel (0) target = $region37
    $region36: #{tpu_custom_call.1} parent=1 // pred_region
      %172 = dma.done [#allocation9], 128
    $region37: #{tpu_custom_call.1} parent=1 // pred_fallthru
      _
    %173 = vsyncpa [#allocation3], 1
    %174 = vsyncpa [#allocation6], 1
    %175 = vsyncpa [#allocation4], 1
    %176 = vsyncpa [#allocation9], 1

// kernel: tpu_custom_call.1
$region0: #{tpu_custom_call.1}
  #allocation0 [shape = 'u32[]', space=smem, size = 0x4, offset = 0x4, fixed_abs, tag = 'smem constant byte address 0x4 - core index']
  #allocation1 [shape = 'u32[144,128]{1,0:T(1,128)}', space=vmem, size = 0x12000, scoped, tag = 'internal scratch']
  %s0 = inlined_call_operand.hbm [shape: f32[8,32], index: 0, kind: input, shape index: {}]
  %s1 = inlined_call_operand.hbm [shape: f32[32,256], index: 1, kind: input, shape index: {}]
  %s2 = inlined_call_operand.vmem [shape: f32[1,256], index: 2, kind: input, shape index: {}]
  %s3 = inlined_call_operand.hbm [shape: f32[8,128], index: 3, kind: output, shape index: {0}]
  %s4 = inlined_call_operand.hbm [shape: f32[8,128], index: 4, kind: output, shape index: {1}]
  %5 = xla_tuple %s3, %s4
  %s6 = sld [smem:[#allocation0]]
  $region38: #{tpu_custom_call.1} parent=0
    _
  %s8 = ssub.s32 1, %s6
  %s9 = scalar_select 0, %s8, %s6
  $region1: #{tpu_custom_call.1} parent=0
    #allocation2 [shape = 'u8[4096]{0}', space=vmem, size = 0x1000, scoped, tag = 'input window, operand 0, single buffered']
    #allocation3 [shape = 's32[1]{0}', space=sflag, size = 0x4, scoped, tag = 'scoped memory for tpu_custom_call.1']
    #allocation4 [shape = 's32[1]{0}', space=sflag, size = 0x4, scoped, tag = 'scoped memory for tpu_custom_call.1']
    #allocation5 [shape = 'u8[32768]{0}', space=vmem, size = 0x8000, scoped, tag = 'input window, operand 1, single buffered']
    #allocation6 [shape = 's32[1]{0}', space=sflag, size = 0x4, scoped, tag = 'scoped memory for tpu_custom_call.1']
    #allocation7 [shape = 'u8[4096]{0}', space=vmem, size = 0x1000, scoped, tag = 'output window, operand 0, single buffered']
    #allocation8 [shape = 'u8[4096]{0}', space=vmem, size = 0x1000, scoped, tag = 'output window, operand 1, single buffered']
    #allocation9 [shape = 's32[1]{0}', space=sflag, size = 0x4, scoped, tag = 'scoped memory for tpu_custom_call.1']
    %10 = vsyncpa [#allocation3], 0
    %11 = vsyncpa [#allocation6], 0
    %12 = vsyncpa [#allocation4], 0
    %13 = vsyncpa [#allocation9], 0
    // Predicated region
    $region2: #{tpu_custom_call.1} parent=1 // pred_check
      _
    $region3: #{tpu_custom_call.1} parent=1 // pred_check_branch
      %15 = sbr.rel (0) target = $region5
    $region4: #{tpu_custom_call.1} parent=1 // pred_region
      %s17 = ssub.s32 128, 128
      %18 = vsyncadd [#allocation3], %s17
      %s20 = sshll.u32 [#allocation2], 4
      %s21 = int_to_ptr.vmem [resolvable:$true] %s20
      %23 = dma.hbm_to_vmem [thread:$0]  %s0, 128, %s21, [#allocation3]
    $region5: #{tpu_custom_call.1} parent=1 // pred_fallthru
      _
    // Predicated region
    $region6: #{tpu_custom_call.1} parent=1 // pred_check
      _
    $region7: #{tpu_custom_call.1} parent=1 // pred_check_branch
      %25 = sbr.rel (0) target = $region9
    $region8: #{tpu_custom_call.1} parent=1 // pred_region
      %s27 = ssub.s32 1024, 1024
      %28 = vsyncadd [#allocation6], %s27
      %s29 = sshll.u32 [#allocation5], 4
      %s30 = int_to_ptr.vmem [resolvable:$true] %s29
      %35 = dma.hbm_to_vmem [thread:$0]  %s1, 1024, %s30, [#allocation6], 256, 256, 16
    $region9: #{tpu_custom_call.1} parent=1 // pred_fallthru
      _
    // Predicated region
    $region10: #{tpu_custom_call.1} parent=1 // pred_check
      _
    $region11: #{tpu_custom_call.1} parent=1 // pred_check_branch
      %37 = sbr.rel (0) target = $region13
    $region12: #{tpu_custom_call.1} parent=1 // pred_region
      _
    $region13: #{tpu_custom_call.1} parent=1 // pred_fallthru
      _
    // Predicated region
    $region14: #{tpu_custom_call.1} parent=1 // pred_check
      _
    $region15: #{tpu_custom_call.1} parent=1 // pred_check_branch
      %39 = sbr.rel (0) target = $region17
    $region16: #{tpu_custom_call.1} parent=1 // pred_region
      %40 = dma.done [#allocation3], 128
    $region17: #{tpu_custom_call.1} parent=1 // pred_fallthru
      _
    // Predicated region
    $region18: #{tpu_custom_call.1} parent=1 // pred_check
      _
    $region19: #{tpu_custom_call.1} parent=1 // pred_check_branch
      %42 = sbr.rel (0) target = $region21
    $region20: #{tpu_custom_call.1} parent=1 // pred_region
      %43 = dma.done [#allocation6], 1024
    $region21: #{tpu_custom_call.1} parent=1 // pred_fallthru
      _
    %v44 = vld [vmem:[#allocation2] sm:$0xff]
    %v45 = vld [vmem:[#allocation5] sm:$0xff]
    %v46 = vld [vmem:[#allocation5 + $0x8] sm:$0xff]
    %v47 = vld [vmem:[#allocation5 + $0x10] sm:$0xff]
    %v48 = vld [vmem:[#allocation5 + $0x18] sm:$0xff]
    %v49 = vld [vmem:[#allocation5 + $0x20] sm:$0xff]
    %v50 = vld [vmem:[#allocation5 + $0x28] sm:$0xff]
    %v51 = vld [vmem:[#allocation5 + $0x30] sm:$0xff]
    %v52 = vld [vmem:[#allocation5 + $0x38] sm:$0xff]
    %v53 = vld [vmem:[%s2] sm:$0x3]
    %v55 = vlaneseq
    %v56 = vshrl.u32 %v55, 7
    %v57 = vsub.s32 0, %v56
    %v58 = vrot.slane %v53, %v57
    %v59 = vlaneseq
    %v60 = vshrl.u32 %v59, 7
    %v61 = vsub.s32 1, %v60
    %v62 = vrot.slane %v53, %v61
    %vm65 = vcmask 261120
    %v67 = vsel %vm65, %v44, 0
    %69 = vmatprep.subr.mxu0 %v46
    %70 = vmatpush1.msra.mxu0 %v45
    %71 = vmatprep.subr.mxu0 %v48
    %72 = vmatpush1.msra.mxu0 %v47
    %73 = vmatprep.subr.mxu0 %v50
    %74 = vmatpush1.msra.mxu0 %v49
    %75 = vmatprep.subr.mxu0 %v52
    %76 = vmatpush1.msra.mxu0 %v51
    %77 = vmatprep.subr.mxu0 0.0
    %78 = vmatpush1.msra.mxu0 0.0
    %79 = vmatprep.subr.mxu0 0.0
    %80 = vmatpush1.msra.mxu0 0.0
    %81 = vmatprep.subr.mxu0 0.0
    %82 = vmatpush1.msra.mxu0 0.0
    %83 = vmatprep.subr.mxu0 0.0
    %84 = vmatpush1.msra.mxu0 0.0
    %85 = vmatprep.subr.mxu0 0.0
    %86 = vmatpush1.msra.mxu0 0.0
    %87 = vmatprep.subr.mxu0 0.0
    %88 = vmatpush1.msra.mxu0 0.0
    %89 = vmatprep.subr.mxu0 0.0
    %90 = vmatpush1.msra.mxu0 0.0
    %91 = vmatprep.subr.mxu0 0.0
    %92 = vmatpush1.msra.mxu0 0.0
    %93 = vmatprep.subr.mxu0 0.0
    %94 = vmatpush1.msra.mxu0 0.0
    %95 = vmatprep.subr.mxu0 0.0
    %96 = vmatpush1.msra.mxu0 0.0
    %97 = vmatprep.subr.mxu0 0.0
    %98 = vmatpush1.msra.mxu0 0.0
    %99 = vmatprep.subr.mxu0 0.0
    %100 = vmatpush1.msra.mxu0 0.0
    %101 = vmatprep.subr.mxu0 0.0
    %102 = vmatpush1.msra.mxu0 0.0
    %103 = vmatprep.subr.mxu0 0.0
    %104 = vmatpush1.msra.mxu0 0.0
    %105 = vmatprep.subr.mxu0 0.0
    %106 = vmatpush1.msra.mxu0 0.0
    %107 = vmatprep.subr.mxu0 0.0
    %108 = vmatpush1.msra.mxu0 0.0
    %109 = vmatprep.subr.mxu0 0.0
    %110 = vmatpush1.msra.mxu0 0.0
    %111 = vmatprep.subr.mxu0 0.0
    %112 = vmatpush1.msra.mxu0 0.0
    %113 = vmatprep.subr.mxu0 0.0
    %114 = vmatpush1.msra.mxu0 0.0
    %115 = vmatprep.subr.mxu0 0.0
    %116 = vmatpush1.msra.mxu0 0.0
    %117 = vmatprep.subr.mxu0 0.0
    %118 = vmatpush1.msra.mxu0 0.0
    %119 = vmatprep.subr.mxu0 0.0
    %120 = vmatpush1.msra.mxu0 0.0
    %121 = vmatprep.subr.mxu0 0.0
    %122 = vmatpush1.msra.mxu0 0.0
    %123 = vmatprep.subr.mxu0 0.0
    %124 = vmatpush1.msra.mxu0 0.0
    %125 = vmatprep.subr.mxu0 0.0
    %126 = vmatpush1.msra.mxu0 0.0
    %127 = vmatprep.subr.mxu0 0.0
    %128 = vmatpush1.msra.mxu0 0.0
    %129 = vmatprep.subr.mxu0 0.0
    %130 = vmatpush1.msra.mxu0 0.0
    %131 = vmatprep.subr.mxu0 0.0
    %132 = vmatpush1.msra.mxu0 0.0
    %133 = vmatprep.mubr.f32.mxu0 0.0
    %134 = vmatmul.mubr.f32.gmra.mrb[0].mxu0 %v67
    %v135 = vpop.f32.mrb[0].mxu0
    %v136 = vadd.f32 %v58, %v135
    %v137 = vpop.f32.mrb[0].mxu0
    %v138 = vadd.f32 %v62, %v137
    %139 = vdwg.mxu0
    %140 = vst [vmem:[#allocation7] sm:$0xff] %v136
    %v141 = vmax.f32 %v138, -6.0
    %v142 = vmin.f32 %v141, 2.0
    %v143 = vmul.f32 %v142, 0.5
    %v144 = vmul.f32 %v143, 1.442695
    %v145 = vpow.pop %v144
    %146 = vst [vmem:[#allocation8] sm:$0xff] %v145
    // Predicated region
    $region22: #{tpu_custom_call.1} parent=1 // pred_check
      _
    $region23: #{tpu_custom_call.1} parent=1 // pred_check_branch
      %148 = sbr.rel (0) target = $region25
    $region24: #{tpu_custom_call.1} parent=1 // pred_region
      %s150 = ssub.s32 128, 128
      %151 = vsyncadd [#allocation4], %s150
      %s153 = sshll.u32 [#allocation7], 4
      %s154 = int_to_ptr.vmem [resolvable:$true] %s153
      %156 = dma.vmem_to_hbm [thread:$0]  %s154, 128, %s3, [#allocation4]
    $region25: #{tpu_custom_call.1} parent=1 // pred_fallthru
      _
    // Predicated region
    $region26: #{tpu_custom_call.1} parent=1 // pred_check
      _
    $region27: #{tpu_custom_call.1} parent=1 // pred_check_branch
      %158 = sbr.rel (0) target = $region29
    $region28: #{tpu_custom_call.1} parent=1 // pred_region
      %s160 = ssub.s32 128, 128
      %161 = vsyncadd [#allocation9], %s160
      %s163 = sshll.u32 [#allocation8], 4
      %s164 = int_to_ptr.vmem [resolvable:$true] %s163
      %166 = dma.vmem_to_hbm [thread:$0]  %s164, 128, %s4, [#allocation9]
    $region29: #{tpu_custom_call.1} parent=1 // pred_fallthru
      _
    // Predicated region
    $region30: #{tpu_custom_call.1} parent=1 // pred_check
      _
    $region31: #{tpu_custom_call.1} parent=1 // pred_check_branch
      %168 = sbr.rel (0) target = $region33
    $region32: #{tpu_custom_call.1} parent=1 // pred_region
      %169 = dma.done [#allocation4], 128
    $region33: #{tpu_custom_call.1} parent=1 // pred_fallthru
      _
    // Predicated region
    $region34: #{tpu_custom_call.1} parent=1 // pred_check
      _
    $region35: #{tpu_custom_call.1} parent=1 // pred_check_branch
      %171 = sbr.rel (0) target = $region37
    $region36: #{tpu_custom_call.1} parent=1 // pred_region
      %172 = dma.done [#allocation9], 128
    $region37: #{tpu_custom_call.1} parent=1 // pred_fallthru
      _
    %173 = vsyncpa [#allocation3], 1
    %174 = vsyncpa [#allocation6], 1
    %175 = vsyncpa [#allocation4], 1
    %176 = vsyncpa [#allocation9], 1

</llo_original>
